<compile_context>
chip_gen: v5e
topology: v5e:2x2
jax: 0.10.0
libtpu: 0.0.40
codegen_flags: <defaults>
</compile_context>

<pallas_src>
import jax
import jax.numpy as jnp
from jax.experimental import pallas as pl
from jax.experimental.pallas import tpu as pltpu

IN_F, HID, OUT_F = 10, 16, 12


def _round_up(n, m):
    return ((n + m - 1) // m) * m


def _choose_tile(batch, batch_tile, min_steps_big=8):
    """Near-equal, 128-aligned batch tiles; caps zero-padding at <128 rows."""
    batch_tile = max(128, _round_up(batch_tile, 128))
    n_steps = pl.cdiv(batch, batch_tile)
    if n_steps > 1:
        # Keep >=8 grid steps on big batches so v7x's two TensorCores each see
        # >=4 pipelined steps (harmless on single-TC v5e/v6e), but never drop a
        # step below 2048 rows.
        n_steps = max(n_steps, min(min_steps_big, pl.cdiv(batch, 2048)))
    tb = _round_up(pl.cdiv(batch, n_steps), 128)
    n_steps = pl.cdiv(batch, tb)
    return tb, tb * n_steps, n_steps


def _vmem_limit(stream_bytes):
    # Double-buffered streaming tiles + headroom; capped to stay comfortably
    # under v7x's 64 MiB physical VMEM per TensorCore (v5e/v6e have 128 MiB).
    return int(min(max(stream_bytes + (4 << 20), 16 << 20), 48 << 20))


# ---------------------------------------------------------------------------
# Feature-major (transposed) kernel: batch on the 128-lane axis.
# ---------------------------------------------------------------------------
def _mlp_kernel_fm(xt_ref, w1_ref, b1_ref, w2_ref, b2_ref, ot_ref):
    #   y^T = W2 @ relu(W1 @ x^T + b1) + b2     (f32 MXU accumulation)
    h = jnp.dot(w1_ref[...], xt_ref[...], preferred_element_type=jnp.float32)
    h = jnp.maximum(h + b1_ref[...], 0.0)            # (hid, tb), bias bcast on lanes
    y = jnp.dot(w2_ref[...], h, preferred_element_type=jnp.float32)
    ot_ref[...] = (y + b2_ref[...]).astype(ot_ref.dtype)


def mlp_forward_feature_major(xt, w1, b1, w2, b2, *, batch_tile=32768):
    """Feature-major MLP forward: xt is (10, B) -> returns (12, B).

    Preferred entry point: no wrapper transposes or copies when the surrounding
    graph keeps activations feature-major.  Weights in torch [out, in] layout.
    """
    in_f, B = xt.shape
    hid, out_f = w1.shape[0], w2.shape[0]
    tb, Bp, n_steps = _choose_tile(B, batch_tile)

    x_in = xt if Bp == B else jnp.pad(xt, ((0, 0), (0, Bp - B)))
    b1c = b1.reshape(hid, 1)
    b2c = b2.reshape(out_f, 1)

    # Streamed tiles: x^T (10->16 sublanes padded) + y^T (12->16), double-buffered.
    stream_bytes = 2 * 2 * (16 * tb * xt.dtype.itemsize)

    yt = pl.pallas_call(
        _mlp_kernel_fm,
        out_shape=jax.ShapeDtypeStruct((out_f, Bp), xt.dtype),
        grid_spec=pltpu.PrefetchScalarGridSpec(
            num_scalar_prefetch=0,
            grid=(n_steps,),
            in_specs=[
                pl.BlockSpec((in_f, tb), lambda i: (0, i)),    # streamed x^T tile
                pl.BlockSpec((hid, in_f), lambda i: (0, 0)),   # W1: VMEM-resident
                pl.BlockSpec((hid, 1), lambda i: (0, 0)),      # b1
                pl.BlockSpec((out_f, hid), lambda i: (0, 0)),  # W2
                pl.BlockSpec((out_f, 1), lambda i: (0, 0)),    # b2
            ],
            out_specs=pl.BlockSpec((out_f, tb), lambda i: (0, i)),  # lane-dense y^T
        ),
        compiler_params=pltpu.CompilerParams(
            dimension_semantics=("parallel",),           # megacore sharding on v7x
            vmem_limit_bytes=_vmem_limit(stream_bytes),
        ),
    )(x_in, w1, b1c, w2, b2c)

    return yt if Bp == B else yt[:, :B]


# ---------------------------------------------------------------------------
# Natural-layout kernel for the fixed (B, F) contract: no wrapper transposes.
# ---------------------------------------------------------------------------
def _mlp_kernel_nat(x_ref, w1t_ref, b1_ref, w2t_ref, b2_ref, o_ref):
    #   y = relu(x @ W1^T + b1) @ W2^T + b2   (weights pre-transposed, tiny)
    h = jnp.dot(x_ref[...], w1t_ref[...], preferred_element_type=jnp.float32)
    h = jnp.maximum(h + b1_ref[...], 0.0)             # (tb, hid), bias bcast on rows
    y = jnp.dot(h, w2t_ref[...], preferred_element_type=jnp.float32)
    o_ref[...] = (y + b2_ref[...]).astype(o_ref.dtype)


def mlp_forward_natural(x, w1, b1, w2, b2, *, batch_tile=4096):
    """Natural-layout MLP forward: x is (B, 10) -> returns (B, 12).

    No wrapper transposes of the activations.  A (tb, 10) block pads lanes
    10->128 inside VMEM (12.8x), so the tile is capped at 8192 rows.
    """
    B, in_f = x.shape
    hid, out_f = w1.shape[0], w2.shape[0]
    tb, Bp, n_steps = _choose_tile(B, min(batch_tile, 8192))

    x_in = x if Bp == B else jnp.pad(x, ((0, Bp - B), (0, 0)))
    w1t = w1.T      # (10, 16)  tiny: layout plumbing on weights is negligible
    w2t = w2.T      # (16, 12)
    b1r = b1.reshape(1, hid)
    b2r = b2.reshape(1, out_f)

    # Streamed tiles pad lanes to 128 in VMEM, double-buffered.
    stream_bytes = 2 * 2 * (tb * 128 * x.dtype.itemsize)

    y = pl.pallas_call(
        _mlp_kernel_nat,
        out_shape=jax.ShapeDtypeStruct((Bp, out_f), x.dtype),
        grid_spec=pltpu.PrefetchScalarGridSpec(
            num_scalar_prefetch=0,
            grid=(n_steps,),
            in_specs=[
                pl.BlockSpec((tb, in_f), lambda i: (i, 0)),    # streamed x tile
                pl.BlockSpec((in_f, hid), lambda i: (0, 0)),   # W1^T: VMEM-resident
                pl.BlockSpec((1, hid), lambda i: (0, 0)),      # b1
                pl.BlockSpec((hid, out_f), lambda i: (0, 0)),  # W2^T
                pl.BlockSpec((1, out_f), lambda i: (0, 0)),    # b2
            ],
            out_specs=pl.BlockSpec((tb, out_f), lambda i: (i, 0)),
        ),
        compiler_params=pltpu.CompilerParams(
            dimension_semantics=("parallel",),
            vmem_limit_bytes=_vmem_limit(stream_bytes),
        ),
    )(x_in, w1t, b1r, w2t, b2r)

    return y if Bp == B else y[:B]


def mlp_forward(x, w1, b1, w2, b2, *, batch_tile=4096, force_pallas=False):
    """MLPModule.forward with the torch (B, F) contract; weights [out, in]."""
    if x.shape[0] < 4096 and not force_pallas:
        # Below ~one tile a single fused XLA expression beats Pallas call
        # overhead (no pipelining to amortize the ~0.35 us per-step cost).
        return jnp.maximum(x @ w1.T + b1, 0.0) @ w2.T + b2
    return mlp_forward_natural(x, w1, b1, w2, b2, batch_tile=batch_tile)


def init_params(key, in_f=IN_F, hid=HID, out_f=OUT_F, dtype=jnp.float32):
    # Mimic torch.nn.Linear default init U(-1/sqrt(fan_in), 1/sqrt(fan_in)),
    # stored in torch layout: weight [out, in], bias [out].
    k1, k2, k3, k4 = jax.random.split(key, 4)
    bound1 = 1.0 / jnp.sqrt(in_f)
    bound2 = 1.0 / jnp.sqrt(hid)
    w1 = jax.random.uniform(k1, (hid, in_f), dtype, -bound1, bound1)
    b1 = jax.random.uniform(k2, (hid,), dtype, -bound1, bound1)
    w2 = jax.random.uniform(k3, (out_f, hid), dtype, -bound2, bound2)
    b2 = jax.random.uniform(k4, (out_f,), dtype, -bound2, bound2)
    return w1, b1, w2, b2


if __name__ == "__main__":
    key = jax.random.PRNGKey(0)
    kx, kp = jax.random.split(key)

    # Small demo: batch deliberately NOT a multiple of 128 so the balanced-tile
    # + pad/slice path is exercised; batch_tile=128 gives a multi-step grid.
    batch = 300
    x = jax.random.normal(kx, (batch, IN_F), dtype=jnp.float32)
    w1, b1, w2, b2 = init_params(kp)

    # Reference in plain JAX (torch semantics: x @ W.T + b).
    ref = jnp.maximum(x @ w1.T + b1, 0.0) @ w2.T + b2

    # 1) Feature-major path (preferred: zero wrapper transposes).
    xt = x.T  # stands in for a graph that keeps activations feature-major
    out_fm = jax.block_until_ready(
        mlp_forward_feature_major(xt, w1, b1, w2, b2, batch_tile=128))
    assert out_fm.shape == (OUT_F, batch), out_fm.shape
    assert jnp.allclose(out_fm.T, ref, atol=1e-5, rtol=1e-5), "fm mismatch"

    # 2) Natural (B, F) contract path.
    out_nat = jax.block_until_ready(
        mlp_forward(x, w1, b1, w2, b2, batch_tile=128, force_pallas=True))
    assert out_nat.shape == (batch, OUT_F), out_nat.shape
    assert jnp.allclose(out_nat, ref, atol=1e-5, rtol=1e-5), "nat mismatch"

    print("KERNEL_OK")
</pallas_src>

<mosaic_0001>
module attributes {stable_mosaic.version = 11 : i64} {
  func.func @_mlp_kernel_fm(%arg0: i32, %arg1: memref<10x128xf32, #tpu.memory_space<vmem>>, %arg2: memref<16x10xf32, #tpu.memory_space<vmem>>, %arg3: memref<16x1xf32, #tpu.memory_space<vmem>>, %arg4: memref<12x16xf32, #tpu.memory_space<vmem>>, %arg5: memref<12x1xf32, #tpu.memory_space<vmem>>, %arg6: memref<12x128xf32, #tpu.memory_space<vmem>>) attributes {dimension_semantics = [#tpu.dimension_semantics<parallel>], iteration_bounds = array<i64: 3>, scalar_prefetch = 0 : i64, scratch_operands = 0 : i64, tpu.core_type = #tpu.core_type<tc>, window_params = [{transform_indices = @transform_0, window_bounds = array<i64: 10, 128>}, {pipeline_mode = #tpu.pipeline_mode<synchronous>, transform_indices = @transform_1, window_bounds = array<i64: 16, 10>}, {pipeline_mode = #tpu.pipeline_mode<synchronous>, transform_indices = @transform_2, window_bounds = array<i64: 16, 1>}, {pipeline_mode = #tpu.pipeline_mode<synchronous>, transform_indices = @transform_3, window_bounds = array<i64: 12, 16>}, {pipeline_mode = #tpu.pipeline_mode<synchronous>, transform_indices = @transform_4, window_bounds = array<i64: 12, 1>}, {transform_indices = @transform_5, window_bounds = array<i64: 12, 128>}]} {
    %c0 = arith.constant 0 : index
    %c0_0 = arith.constant 0 : index
    %0 = vector.load %arg2[%c0, %c0_0] : memref<16x10xf32, #tpu.memory_space<vmem>>, vector<16x10xf32>
    %c0_1 = arith.constant 0 : index
    %c0_2 = arith.constant 0 : index
    %1 = vector.load %arg1[%c0_1, %c0_2] : memref<10x128xf32, #tpu.memory_space<vmem>>, vector<10x128xf32>
    %cst = arith.constant dense<0.000000e+00> : vector<16x128xf32>
    %2 = tpu.matmul %0, %1, %cst {dimension_numbers = #tpu.dot_dimension_numbers<[1], [0], [0], [1], [0, 0, 1, 1], [], []>} : vector<16x10xf32>, vector<10x128xf32>, vector<16x128xf32> -> vector<16x128xf32>
    %c0_3 = arith.constant 0 : index
    %c0_4 = arith.constant 0 : index
    %3 = vector.load %arg3[%c0_3, %c0_4] : memref<16x1xf32, #tpu.memory_space<vmem>>, vector<16x1xf32>
    %4 = vector.broadcast %3 : vector<16x1xf32> to vector<16x128xf32>
    %5 = arith.addf %2, %4 : vector<16x128xf32>
    %cst_5 = arith.constant 0.000000e+00 : f32
    %6 = vector.broadcast %cst_5 : f32 to vector<16x128xf32>
    %7 = arith.maximumf %5, %6 : vector<16x128xf32>
    %c0_6 = arith.constant 0 : index
    %c0_7 = arith.constant 0 : index
    %8 = vector.load %arg4[%c0_6, %c0_7] : memref<12x16xf32, #tpu.memory_space<vmem>>, vector<12x16xf32>
    %cst_8 = arith.constant dense<0.000000e+00> : vector<12x128xf32>
    %9 = tpu.matmul %8, %7, %cst_8 {dimension_numbers = #tpu.dot_dimension_numbers<[1], [0], [0], [1], [0, 0, 1, 1], [], []>} : vector<12x16xf32>, vector<16x128xf32>, vector<12x128xf32> -> vector<12x128xf32>
    %c0_9 = arith.constant 0 : index
    %c0_10 = arith.constant 0 : index
    %10 = vector.load %arg5[%c0_9, %c0_10] : memref<12x1xf32, #tpu.memory_space<vmem>>, vector<12x1xf32>
    %11 = vector.broadcast %10 : vector<12x1xf32> to vector<12x128xf32>
    %12 = arith.addf %9, %11 : vector<12x128xf32>
    %c0_11 = arith.constant 0 : index
    %c0_12 = arith.constant 0 : index
    %13 = vector.load %arg6[%c0_11, %c0_12] : memref<12x128xf32, #tpu.memory_space<vmem>>, vector<12x128xf32>
    tpu.vector_store %arg6[%c0_11, %c0_12], %12 {strides = array<i32>} : memref<12x128xf32, #tpu.memory_space<vmem>>, vector<12x128xf32>,
    return
  }
  func.func @transform_0(%arg0: i32) -> (i32, i32) {
    %c0_i32 = arith.constant 0 : i32
    %c0_i32_0 = arith.constant 0 : i32
    return %c0_i32, %arg0 : i32, i32
  }
  func.func @transform_1(%arg0: i32) -> (i32, i32) {
    %c0_i32 = arith.constant 0 : i32
    %c0_i32_0 = arith.constant 0 : i32
    %c0_i32_1 = arith.constant 0 : i32
    return %c0_i32, %c0_i32_0 : i32, i32
  }
  func.func @transform_2(%arg0: i32) -> (i32, i32) {
    %c0_i32 = arith.constant 0 : i32
    %c0_i32_0 = arith.constant 0 : i32
    %c0_i32_1 = arith.constant 0 : i32
    return %c0_i32, %c0_i32_0 : i32, i32
  }
  func.func @transform_3(%arg0: i32) -> (i32, i32) {
    %c0_i32 = arith.constant 0 : i32
    %c0_i32_0 = arith.constant 0 : i32
    %c0_i32_1 = arith.constant 0 : i32
    return %c0_i32, %c0_i32_0 : i32, i32
  }
  func.func @transform_4(%arg0: i32) -> (i32, i32) {
    %c0_i32 = arith.constant 0 : i32
    %c0_i32_0 = arith.constant 0 : i32
    %c0_i32_1 = arith.constant 0 : i32
    return %c0_i32, %c0_i32_0 : i32, i32
  }
  func.func @transform_5(%arg0: i32) -> (i32, i32) {
    %c0_i32 = arith.constant 0 : i32
    %c0_i32_0 = arith.constant 0 : i32
    return %c0_i32, %arg0 : i32, i32
  }
}

</mosaic_0001>

<llo_original>
// kernel: tpu_custom_call.1
$region0: #{tpu_custom_call.1}
  #allocation0 [shape = 'u32[]', space=smem, size = 0x4, offset = 0x4, fixed_abs, tag = 'smem constant byte address 0x4 - core index']
  #allocation1 [shape = 'u32[72,128]{1,0:T(1,128)}', space=vmem, size = 0x9000, scoped, tag = 'internal scratch']
  %s0 = inlined_call_operand.hbm [shape: f32[10,384], index: 0, kind: input, shape index: {}]
  %s1 = inlined_call_operand.vmem [shape: f32[16,10], index: 1, kind: input, shape index: {}]
  %s2 = inlined_call_operand.vmem [shape: f32[16,1], index: 2, kind: input, shape index: {}]
  %s3 = inlined_call_operand.vmem [shape: f32[12,16], index: 3, kind: input, shape index: {}]
  %s4 = inlined_call_operand.vmem [shape: f32[12,1], index: 4, kind: input, shape index: {}]
  %s5 = inlined_call_operand.hbm [shape: f32[12,384], index: 5, kind: output, shape index: {}]
  %s6 = sld [smem:[#allocation0]]
  $region57: #{tpu_custom_call.1} parent=0
    _
  %s8 = ssub.s32 1, %s6
  %s9 = scalar_select 0, %s8, %s6
  $region1: #{tpu_custom_call.1} parent=0
    #allocation2 [shape = 'u8[16384]{0}', space=vmem, size = 0x4000, scoped, tag = 'input window, operand 0']
    #allocation3 [shape = 's32[2]{0}', space=sflag, size = 0x8, scoped, tag = 'scoped memory for tpu_custom_call.1']
    #allocation4 [shape = 's32[2]{0}', space=sflag, size = 0x8, scoped, tag = 'scoped memory for tpu_custom_call.1']
    #allocation5 [shape = 'u8[16384]{0}', space=vmem, size = 0x4000, scoped, tag = 'output window, operand 0']
    %10 = vsyncpa [#allocation3], 0
    %s11 = scalar_lea.sflag [#allocation3], 1
    %12 = vsyncpa %s11, 0
    %13 = vsyncpa [#allocation4], 0
    %s14 = scalar_lea.sflag [#allocation4], 1
    %15 = vsyncpa %s14, 0
    loop: start=0, step=1, limit=5
    $region2: #{tpu_custom_call.1} parent=1 // loop_pre_header
      _
    $region3: #{tpu_custom_call.1} parent=1 // loop_header
      %s17 = sphi 0, %s21
      %p18 = scmp.ge.s32.totalorder %s17, 5
      %s27 = sphi 0, %s29
      %s30 = sphi 0, %s27
      %s31 = sphi 0, %s30
      %s47 = sphi 0, %s31
      %s51 = sphi 0, %s51
      %s53 = sphi 0, %s51
      %s54 = sphi 0, %s53
      %s68 = sphi 0, %s54
      %s72 = sphi 0, %s72
      %s74 = sphi 0, %s72
      %s75 = sphi 0, %s74
      %s89 = sphi 0, %s75
      %s93 = sphi 0, %s93
      %s95 = sphi 0, %s93
      %s96 = sphi 0, %s95
      %s110 = sphi 0, %s96
      %s114 = sphi 0, %s114
      %s116 = sphi 0, %s114
      %s117 = sphi 0, %s116
      %s131 = sphi 0, %s117
      %s137 = sphi 0, %s139
      %s140 = sphi 0, %s137
      %s141 = sphi 0, %s140
      %s157 = sphi 0, %s141
    $region4: #{tpu_custom_call.1} parent=1 // loop_header_branch
      %20 = sbr.rel (%p18) target = $region8
    $region5: #{tpu_custom_call.1} parent=1 // loop_body
      %s22 = ssub.s32 %s17, 1
      %s23 = ssub.s32 %s17, 2
      %s24 = sadd.s32 %s17, 1
      %s25 = ssub.s32 %s17, %s24
      %p26 = scmp.eq.s32.totalorder %s25, 0
      %s28 = sadd.s32 %s27, 1
      %s29 = scalar_select %p26, %s27, %s28
      %p32 = pneg %p26
      %p33 = scmp.eq.s32.totalorder %s17, 2
      %p34 = por %p32, %p33
      %p35 = scmp.ne.s32.totalorder %s27, %s30
      %p36 = scmp.eq.s32.totalorder %s17, 0
      %p37 = por %p35, %p36
      %p38 = scmp.ne.s32.totalorder %s27, %s30
      %p39 = scmp.eq.s32.totalorder %s22, 2
      %p40 = por %p38, %p39
      %p41 = scmp.ne.s32.totalorder %s30, %s31
      %p42 = scmp.eq.s32.totalorder %s22, 0
      %p43 = por %p41, %p42
      %p44 = scmp.ne.s32.totalorder %s30, %s31
      %p45 = scmp.eq.s32.totalorder %s23, 2
      %p46 = por %p44, %p45
      %p48 = scmp.ne.s32.totalorder %s31, %s47
      %p49 = scmp.eq.s32.totalorder %s23, 0
      %p50 = por %p48, %p49
      %s52 = sadd.s32 %s51, 1
      %p55 = scmp.eq.s32.totalorder %s17, 2
      %p56 = scmp.ne.s32.totalorder %s51, %s53
      %p57 = scmp.eq.s32.totalorder %s17, 0
      %p58 = por %p56, %p57
      %p59 = scmp.ne.s32.totalorder %s51, %s53
      %p60 = scmp.eq.s32.totalorder %s22, 2
      %p61 = por %p59, %p60
      %p62 = scmp.ne.s32.totalorder %s53, %s54
      %p63 = scmp.eq.s32.totalorder %s22, 0
      %p64 = por %p62, %p63
      %p65 = scmp.ne.s32.totalorder %s53, %s54
      %p66 = scmp.eq.s32.totalorder %s23, 2
      %p67 = por %p65, %p66
      %p69 = scmp.ne.s32.totalorder %s54, %s68
      %p70 = scmp.eq.s32.totalorder %s23, 0
      %p71 = por %p69, %p70
      %s73 = sadd.s32 %s72, 1
      %p76 = scmp.eq.s32.totalorder %s17, 2
      %p77 = scmp.ne.s32.totalorder %s72, %s74
      %p78 = scmp.eq.s32.totalorder %s17, 0
      %p79 = por %p77, %p78
      %p80 = scmp.ne.s32.totalorder %s72, %s74
      %p81 = scmp.eq.s32.totalorder %s22, 2
      %p82 = por %p80, %p81
      %p83 = scmp.ne.s32.totalorder %s74, %s75
      %p84 = scmp.eq.s32.totalorder %s22, 0
      %p85 = por %p83, %p84
      %p86 = scmp.ne.s32.totalorder %s74, %s75
      %p87 = scmp.eq.s32.totalorder %s23, 2
      %p88 = por %p86, %p87
      %p90 = scmp.ne.s32.totalorder %s75, %s89
      %p91 = scmp.eq.s32.totalorder %s23, 0
      %p92 = por %p90, %p91
      %s94 = sadd.s32 %s93, 1
      %p97 = scmp.eq.s32.totalorder %s17, 2
      %p98 = scmp.ne.s32.totalorder %s93, %s95
      %p99 = scmp.eq.s32.totalorder %s17, 0
      %p100 = por %p98, %p99
      %p101 = scmp.ne.s32.totalorder %s93, %s95
      %p102 = scmp.eq.s32.totalorder %s22, 2
      %p103 = por %p101, %p102
      %p104 = scmp.ne.s32.totalorder %s95, %s96
      %p105 = scmp.eq.s32.totalorder %s22, 0
      %p106 = por %p104, %p105
      %p107 = scmp.ne.s32.totalorder %s95, %s96
      %p108 = scmp.eq.s32.totalorder %s23, 2
      %p109 = por %p107, %p108
      %p111 = scmp.ne.s32.totalorder %s96, %s110
      %p112 = scmp.eq.s32.totalorder %s23, 0
      %p113 = por %p111, %p112
      %s115 = sadd.s32 %s114, 1
      %p118 = scmp.eq.s32.totalorder %s17, 2
      %p119 = scmp.ne.s32.totalorder %s114, %s116
      %p120 = scmp.eq.s32.totalorder %s17, 0
      %p121 = por %p119, %p120
      %p122 = scmp.ne.s32.totalorder %s114, %s116
      %p123 = scmp.eq.s32.totalorder %s22, 2
      %p124 = por %p122, %p123
      %p125 = scmp.ne.s32.totalorder %s116, %s117
      %p126 = scmp.eq.s32.totalorder %s22, 0
      %p127 = por %p125, %p126
      %p128 = scmp.ne.s32.totalorder %s116, %s117
      %p129 = scmp.eq.s32.totalorder %s23, 2
      %p130 = por %p128, %p129
      %p132 = scmp.ne.s32.totalorder %s117, %s131
      %p133 = scmp.eq.s32.totalorder %s23, 0
      %p134 = por %p132, %p133
      %s135 = ssub.s32 %s17, %s24
      %p136 = scmp.eq.s32.totalorder %s135, 0
      %s138 = sadd.s32 %s137, 1
      %s139 = scalar_select %p136, %s137, %s138
      %p142 = pneg %p136
      %p143 = scmp.eq.s32.totalorder %s17, 2
      %p144 = por %p142, %p143
      %p145 = scmp.ne.s32.totalorder %s137, %s140
      %p146 = scmp.eq.s32.totalorder %s17, 0
      %p147 = por %p145, %p146
      %p148 = scmp.ne.s32.totalorder %s137, %s140
      %p149 = scmp.eq.s32.totalorder %s22, 2
      %p150 = por %p148, %p149
      %p151 = scmp.ne.s32.totalorder %s140, %s141
      %p152 = scmp.eq.s32.totalorder %s22, 0
      %p153 = por %p151, %p152
      %p154 = scmp.ne.s32.totalorder %s140, %s141
      %p155 = scmp.eq.s32.totalorder %s23, 2
      %p156 = por %p154, %p155
      %p158 = scmp.ne.s32.totalorder %s141, %s157
      %p159 = scmp.eq.s32.totalorder %s23, 0
      %p160 = por %p158, %p159
      %p161 = scmp.le.s32.totalorder 1, %s17
      %p162 = scmp.lt.s32.totalorder %s17, 4
      %p163 = pnand %p161, %p162
      %p164 = pneg %p163
      // Predicated region
      $region9: #{tpu_custom_call.1} parent=5 // pred_check
        _
      $region10: #{tpu_custom_call.1} parent=5 // pred_check_branch
        %166 = sbr.rel (%p163) target = $region12
      $region11: #{tpu_custom_call.1} parent=5 // pred_region
        %s167 = ssub.s32 %s17, 1
        // Predicated region
        $region13: #{tpu_custom_call.1} parent=11 // pred_check
          %p168 = pneg %p64
        $region14: #{tpu_custom_call.1} parent=11 // pred_check_branch
          %170 = sbr.rel (%p168) target = $region16
        $region15: #{tpu_custom_call.1} parent=11 // pred_region
          _
        $region16: #{tpu_custom_call.1} parent=11 // pred_fallthru
          _
        // Predicated region
        $region17: #{tpu_custom_call.1} parent=11 // pred_check
          %p171 = pneg %p85
        $region18: #{tpu_custom_call.1} parent=11 // pred_check_branch
          %173 = sbr.rel (%p171) target = $region20
        $region19: #{tpu_custom_call.1} parent=11 // pred_region
          _
        $region20: #{tpu_custom_call.1} parent=11 // pred_fallthru
          _
        // Predicated region
        $region21: #{tpu_custom_call.1} parent=11 // pred_check
          %p174 = pneg %p106
        $region22: #{tpu_custom_call.1} parent=11 // pred_check_branch
          %176 = sbr.rel (%p174) target = $region24
        $region23: #{tpu_custom_call.1} parent=11 // pred_region
          _
        $region24: #{tpu_custom_call.1} parent=11 // pred_fallthru
          _
        // Predicated region
        $region25: #{tpu_custom_call.1} parent=11 // pred_check
          %p177 = pneg %p127
        $region26: #{tpu_custom_call.1} parent=11 // pred_check_branch
          %179 = sbr.rel (%p177) target = $region28
        $region27: #{tpu_custom_call.1} parent=11 // pred_region
          _
        $region28: #{tpu_custom_call.1} parent=11 // pred_fallthru
          _
      $region12: #{tpu_custom_call.1} parent=5 // pred_fallthru
        _
      %p180 = scmp.lt.s32.totalorder %s17, 3
      // Predicated region
      $region29: #{tpu_custom_call.1} parent=5 // pred_check
        %p181 = pneg %p180
      $region30: #{tpu_custom_call.1} parent=5 // pred_check_branch
        %183 = sbr.rel (%p181) target = $region32
      $region31: #{tpu_custom_call.1} parent=5 // pred_region
        // Predicated region
        $region33: #{tpu_custom_call.1} parent=31 // pred_check
          %p184 = pneg %p37
        $region34: #{tpu_custom_call.1} parent=31 // pred_check_branch
          %186 = sbr.rel (%p184) target = $region36
        $region35: #{tpu_custom_call.1} parent=31 // pred_region
          %s187 = sand.u32 %s27, 1
          %s188 = scalar_lea.sflag [#allocation3], %s187
          %s189 = sand.u32 %s27, 1
          %s190 = smul.addr %s189, 16
          %s191 = scalar_lea.vmem [#allocation2], %s190
          %193 = vsyncadd %s188, 0
          %s194 = smul.addr %s17, 8
          %s195 = scalar_lea.hbm %s0, %s194
          %s196 = sshll.u32 %s195, 4
          %s197 = int_to_ptr.hbm [resolvable:$true] %s196
          %s198 = sshll.u32 %s191, 4
          %s199 = int_to_ptr.vmem [resolvable:$true] %s198
          %204 = dma.hbm_to_vmem [thread:$0]  %s197, 256, %s199, %s188, 384, 128, 8
        $region36: #{tpu_custom_call.1} parent=31 // pred_fallthru
          _
      $region32: #{tpu_custom_call.1} parent=5 // pred_fallthru
        _
      %p205 = scmp.le.s32.totalorder 1, %s17
      %p206 = scmp.lt.s32.totalorder %s17, 4
      %p207 = pnand %p205, %p206
      %p208 = pneg %p207
      // Predicated region
      $region37: #{tpu_custom_call.1} parent=5 // pred_check
        _
      $region38: #{tpu_custom_call.1} parent=5 // pred_check_branch
        %210 = sbr.rel (%p207) target = $region40
      $region39: #{tpu_custom_call.1} parent=5 // pred_region
        %s211 = ssub.s32 %s17, 1
        %s212 = sand.u32 %s30, 1
        %s213 = scalar_lea.sflag [#allocation3], %s212
        %s214 = sand.u32 %s30, 1
        %s215 = smul.addr %s214, 16
        %s216 = scalar_lea.vmem [#allocation2], %s215
        // Predicated region
        $region41: #{tpu_custom_call.1} parent=39 // pred_check
          %p217 = pneg %p43
        $region42: #{tpu_custom_call.1} parent=39 // pred_check_branch
          %219 = sbr.rel (%p217) target = $region44
        $region43: #{tpu_custom_call.1} parent=39 // pred_region
          %221 = dma.done %s213, 256
        $region44: #{tpu_custom_call.1} parent=39 // pred_fallthru
          _
        %s222 = sand.u32 %s30, 1
        %s223 = scalar_lea.sflag [#allocation3], %s222
        %s224 = sand.u32 %s30, 1
        %s225 = smul.addr %s224, 16
        %s226 = scalar_lea.vmem [#allocation2], %s225
        %p227 = pneg %p43
        %p228 = pneg %p40
        %p229 = pneg %p64
        %p230 = pneg %p61
        %p231 = pneg %p85
        %p232 = pneg %p82
        %p233 = pneg %p106
        %p234 = pneg %p103
        %p235 = pneg %p127
        %p236 = pneg %p124
        %p237 = pneg %p153
        %p238 = pneg %p150
        %s239 = sand.u32 %s140, 1
        %s240 = scalar_lea.sflag [#allocation4], %s239
        %s241 = sand.u32 %s140, 1
        %s242 = smul.addr %s241, 16
        %s243 = scalar_lea.vmem [#allocation5], %s242
        %v244 = vld [vmem:[%s1] sm:$0xff]
        %v245 = vld [vmem:[%s1 + $0x8] sm:$0xff]
        %v246 = vld [vmem:[%s216] sm:$0xff]
        %v247 = vld [vmem:[%s216 + $0x8] sm:$0x3]
        %v248 = vld [vmem:[%s2] sm:$0xff]
        %v249 = vld [vmem:[%s2 + $0x8] sm:$0xff]
        %251 = vset.pattern.permute.xlu0 0
        %252 = vperm.xlu0 %251, %v248
        %v253 = vpop.permute.xlu0 %252
        %256 = vset.pattern.permute.xlu0 0
        %257 = vperm.xlu0 %256, %v249
        %v258 = vpop.permute.xlu0 %257
        %vm260 = vcmask 80896
        %v262 = vsel %vm260, %v244, 0
        %v265 = vsel %vm260, %v245, 0
        %vm267 = vcmask 1041408
        %v269 = vsel %vm267, %v247, 0
        %271 = vmatpush.msra.mxu0 0.0
        %272 = vmatpush.msra.mxu0 0.0
        %273 = vmatpush.msra.mxu0 0.0
        %274 = vmatpush.msra.mxu0 0.0
        %275 = vmatpush.msra.mxu0 0.0
        %276 = vmatpush.msra.mxu0 0.0
        %277 = vmatpush.msra.mxu0 0.0
        %278 = vmatpush.msra.mxu0 0.0
        %279 = vmatpush.msra.mxu0 0.0
        %280 = vmatpush.msra.mxu0 0.0
        %281 = vmatpush.msra.mxu0 0.0
        %282 = vmatpush.msra.mxu0 0.0
        %283 = vmatpush.msra.mxu0 0.0
        %284 = vmatpush.msra.mxu0 0.0
        %285 = vmatpush.msra.mxu0 %v269
        %286 = vmatpush.msra.mxu0 %v246
        %287 = vmatmul.f32.gmra.mxu0 %v262
        %v288 = vpop.f32.mrf.mxu0
        %v289 = vadd.f32 %v253, %v288
        %290 = vmatmul.f32.gmra.mxu0 %v265
        %v291 = vpop.f32.mrf.mxu0
        %v292 = vadd.f32 %v258, %v291
        %293 = vdwg.mxu0
        %v294 = vmax.f32 %v289, 0.0
        %v295 = vmax.f32 %v292, 0.0
        %v296 = vld [vmem:[%s3] sm:$0xff]
        %v297 = vld [vmem:[%s3 + $0x8] sm:$0xf]
        %v298 = vld [vmem:[%s4] sm:$0xff]
        %v299 = vld [vmem:[%s4 + $0x8] sm:$0xf]
        %301 = vset.pattern.permute.xlu0 0
        %302 = vperm.xlu0 %301, %v298
        %v303 = vpop.permute.xlu0 %302
        %306 = vset.pattern.permute.xlu0 0
        %307 = vperm.xlu0 %306, %v299
        %v308 = vpop.permute.xlu0 %307
        %vm310 = vcmask 130048
        %v312 = vsel %vm310, %v296, 0
        %v315 = vsel %vm310, %v297, 0
        %317 = vmatpush.msra.mxu0 0.0
        %318 = vmatpush.msra.mxu0 0.0
        %319 = vmatpush.msra.mxu0 0.0
        %320 = vmatpush.msra.mxu0 0.0
        %321 = vmatpush.msra.mxu0 0.0
        %322 = vmatpush.msra.mxu0 0.0
        %323 = vmatpush.msra.mxu0 0.0
        %324 = vmatpush.msra.mxu0 0.0
        %325 = vmatpush.msra.mxu0 0.0
        %326 = vmatpush.msra.mxu0 0.0
        %327 = vmatpush.msra.mxu0 0.0
        %328 = vmatpush.msra.mxu0 0.0
        %329 = vmatpush.msra.mxu0 0.0
        %330 = vmatpush.msra.mxu0 0.0
        %331 = vmatpush.msra.mxu0 %v295
        %332 = vmatpush.msra.mxu0 %v294
        %333 = vmatmul.f32.gmra.mxu0 %v312
        %v334 = vpop.f32.mrf.mxu0
        %v335 = vadd.f32 %v303, %v334
        %336 = vmatmul.f32.gmra.mxu0 %v315
        %v337 = vpop.f32.mrf.mxu0
        %v338 = vadd.f32 %v308, %v337
        %339 = vdwg.mxu0
        %340 = vst [vmem:[%s243] sm:$0xff] %v335
        %341 = vst [vmem:[%s243 + $0x8] sm:$0xf] %v338
        %s342 = sand.u32 %s140, 1
        %s343 = scalar_lea.sflag [#allocation4], %s342
        %s344 = sand.u32 %s140, 1
        %s345 = smul.addr %s344, 16
        %s346 = scalar_lea.vmem [#allocation5], %s345
        // Predicated region
        $region45: #{tpu_custom_call.1} parent=39 // pred_check
          %p347 = pneg %p150
        $region46: #{tpu_custom_call.1} parent=39 // pred_check_branch
          %349 = sbr.rel (%p347) target = $region48
        $region47: #{tpu_custom_call.1} parent=39 // pred_region
          %351 = vsyncadd %s343, 0
          %s352 = smul.addr %s22, 8
          %s353 = scalar_lea.hbm %s5, %s352
          %s354 = sshll.u32 %s346, 4
          %s355 = int_to_ptr.vmem [resolvable:$true] %s354
          %s356 = sshll.u32 %s353, 4
          %s357 = int_to_ptr.hbm [resolvable:$true] %s356
          %362 = dma.vmem_to_hbm [thread:$0]  %s355, 256, %s357, %s343, 128, 384, 8
        $region48: #{tpu_custom_call.1} parent=39 // pred_fallthru
          _
      $region40: #{tpu_custom_call.1} parent=5 // pred_fallthru
        _
      %p363 = scmp.le.s32.totalorder 2, %s17
      // Predicated region
      $region49: #{tpu_custom_call.1} parent=5 // pred_check
        %p364 = pneg %p363
      $region50: #{tpu_custom_call.1} parent=5 // pred_check_branch
        %366 = sbr.rel (%p364) target = $region52
      $region51: #{tpu_custom_call.1} parent=5 // pred_region
        %s367 = ssub.s32 %s17, 2
        // Predicated region
        $region53: #{tpu_custom_call.1} parent=51 // pred_check
          %p368 = pneg %p156
        $region54: #{tpu_custom_call.1} parent=51 // pred_check_branch
          %370 = sbr.rel (%p368) target = $region56
        $region55: #{tpu_custom_call.1} parent=51 // pred_region
          %s371 = sand.u32 %s141, 1
          %s372 = scalar_lea.sflag [#allocation4], %s371
          %s373 = sand.u32 %s141, 1
          %s374 = smul.addr %s373, 16
          %s375 = scalar_lea.vmem [#allocation5], %s374
          %377 = dma.done %s372, 256
        $region56: #{tpu_custom_call.1} parent=51 // pred_fallthru
          _
      $region52: #{tpu_custom_call.1} parent=5 // pred_fallthru
        _
    $region6: #{tpu_custom_call.1} parent=1 // loop_footer
      %s21 = sadd.s32 1, %s17
    $region7: #{tpu_custom_call.1} parent=1 // loop_footer_branch
      %16 = sbr.rel target = $region3
    $region8: #{tpu_custom_call.1} parent=1 // loop_exit
      _
    %378 = vsyncpa [#allocation3], 1
    %s379 = scalar_lea.sflag [#allocation3], 1
    %380 = vsyncpa %s379, 1
    %381 = vsyncpa [#allocation4], 1
    %s382 = scalar_lea.sflag [#allocation4], 1
    %383 = vsyncpa %s382, 1

</llo_original>
